<compile_context>
chip_gen: v7x
topology: tpu7x:2x2x1
jax: 0.10.0
libtpu: 0.0.40
codegen_flags: <defaults>
</compile_context>

<pallas_src>
import jax
import jax.numpy as jnp
from jax.experimental import pallas as pl
from jax.experimental.pallas import tpu as pltpu


def _round_up(x, m):
    return ((x + m - 1) // m) * m


# ----------------------------------------------------------------------------
# Pallas kernel: fused chain  (matmul + bias + relu) x n_hidden -> matmul+bias
# operating in the channels-major ("transposed") layout.
# ----------------------------------------------------------------------------
def _make_fused_kernel(n_hidden, compute_dtype=jnp.bfloat16):
    def kernel(*refs):
        x_ref = refs[0]           # [1, Cin, tp] f32 (straight from NCHW)
        out_ref = refs[-1]        # [1, Cpad, tp] out_dtype
        wrefs = refs[1:-1]        # [Wt0, b0, Wt1, b1, ..., Wtf, bf]

        # Cast after the DMA; HBM only ever sees the f32 map once.
        h = x_ref[0].astype(compute_dtype)            # [Cin, tp] bf16
        for li in range(n_hidden):
            w = wrefs[2 * li][...]                     # [Cout, K] bf16
            b = wrefs[2 * li + 1][...]                 # [Cout, 1] f32
            acc = jnp.dot(w, h, preferred_element_type=jnp.float32) + b
            h = jnp.maximum(acc, 0.0).astype(compute_dtype)

        wf = wrefs[2 * n_hidden][...]                  # [Cpad, K] bf16
        bf = wrefs[2 * n_hidden + 1][...]              # [Cpad, 1] f32
        out = jnp.dot(wf, h, preferred_element_type=jnp.float32) + bf
        out_ref[0] = out.astype(out_ref.dtype)

    return kernel


def _run_fused(x3, layers, cpad, n_hidden, tp, out_dtype, vmem_limit):
    """x3: [B, Cin, HW] f32 (NCHW, spatial flattened). layers: transposed fused."""
    B, Cin, HW = x3.shape
    grid = (B, pl.cdiv(HW, tp))

    in_specs = [pl.BlockSpec((1, Cin, tp), lambda b, i: (b, 0, i))]
    args = [x3]
    flops = 0
    out_bytes = jnp.dtype(out_dtype).itemsize
    bytes_accessed = x3.size * x3.dtype.itemsize + B * HW * cpad * out_bytes
    for (w, b) in layers:
        # Constant index map: same block every step -> Pallas does not re-DMA.
        in_specs.append(pl.BlockSpec(w.shape, lambda bb, ii: (0, 0)))
        in_specs.append(pl.BlockSpec(b.shape, lambda bb, ii: (0, 0)))
        args.append(w)
        args.append(b)
        flops += 2 * B * HW * w.shape[0] * w.shape[1]
        bytes_accessed += w.size * w.dtype.itemsize + b.size * b.dtype.itemsize

    out_spec = pl.BlockSpec((1, cpad, tp), lambda b, i: (b, 0, i))

    return pl.pallas_call(
        _make_fused_kernel(n_hidden),
        out_shape=jax.ShapeDtypeStruct((B, cpad, HW), out_dtype),
        grid_spec=pltpu.PrefetchScalarGridSpec(
            num_scalar_prefetch=0,
            grid=grid,
            in_specs=in_specs,
            out_specs=out_spec,
        ),
        compiler_params=pltpu.CompilerParams(
            dimension_semantics=("parallel", "parallel"),
            vmem_limit_bytes=int(vmem_limit)),
        cost_estimate=pl.CostEstimate(
            flops=int(flops), transcendentals=0,
            bytes_accessed=int(bytes_accessed)),
    )(*args)


# ----------------------------------------------------------------------------
# Parameter construction (deterministic, synthetic) with BN folding
# ----------------------------------------------------------------------------
def init_separate_head_params(key, in_channels, heads, head_conv=64,
                              init_bias=-2.19, bn_eps=1e-5):
    """Returns {head: [(W[c_in,c_out] f32, b[1,c_out] f32), ...]}, BN folded."""
    params = {}
    for head, (classes, num_conv) in heads.items():
        key, sub = jax.random.split(key)
        layers = []
        c_in = in_channels
        for _ in range(num_conv - 1):
            sub, kw, kg, kb, km, kv = jax.random.split(sub, 6)
            w = jax.random.normal(kw, (c_in, head_conv), jnp.float32) * jnp.sqrt(
                2.0 / c_in)
            gamma = jax.random.uniform(kg, (head_conv,), jnp.float32, 0.5, 1.5)
            beta = 0.1 * jax.random.normal(kb, (head_conv,), jnp.float32)
            rmean = 0.1 * jax.random.normal(km, (head_conv,), jnp.float32)
            rvar = jax.random.uniform(kv, (head_conv,), jnp.float32, 0.5, 1.5)
            scale = gamma / jnp.sqrt(rvar + bn_eps)
            layers.append((w * scale[None, :], (beta - rmean * scale)[None, :]))
            c_in = head_conv
        sub, kw, kb = jax.random.split(sub, 3)
        wf = jax.random.normal(kw, (c_in, classes), jnp.float32) * jnp.sqrt(
            2.0 / c_in)
        if head == "heatmap":
            bf = jnp.full((1, classes), init_bias, jnp.float32)  # init_weights()
        else:
            bf = 0.1 * jax.random.normal(kb, (1, classes), jnp.float32)
        layers.append((wf, bf))
        params[head] = layers
    return params


def fuse_head_params(params, heads, head_conv, weight_dtype=jnp.bfloat16,
                     lane=128):
    """Fuse all heads into one chain of TRANSPOSED matmuls.

    Returns (fused_layers, offsets, Cpad, n_hidden) where
      fused_layers = [(Wt [Cout, Cin] weight_dtype, b [Cout, 1] f32), ...]
      offsets[head] = (row_offset, classes) into the padded output height Cpad.
    """
    names = list(heads.keys())
    num_convs = {heads[n][1] for n in names}
    assert len(num_convs) == 1, "fused path expects equal num_conv per head"
    num_conv = num_convs.pop()
    n_hidden = num_conv - 1
    nh = len(names)

    offsets, off = {}, 0
    for n in names:
        offsets[n] = (off, heads[n][0])
        off += heads[n][0]
    cpad = max(lane, _round_up(off, lane))

    fused = []
    if n_hidden >= 1:
        # Layer 0: shared input -> concatenate heads along output channels.
        w0 = jnp.concatenate([params[n][0][0].T for n in names], axis=0)
        b0 = jnp.concatenate([params[n][0][1].T for n in names], axis=0)
        fused.append((w0.astype(weight_dtype), b0.astype(jnp.float32)))
        # Deeper hidden layers: block-diagonal (see TODO(synk) about v5e).
        for li in range(1, n_hidden):
            wbd = jnp.zeros((nh * head_conv, nh * head_conv), jnp.float32)
            bcat = []
            for hi, n in enumerate(names):
                w, b = params[n][li]
                wbd = wbd.at[hi * head_conv:(hi + 1) * head_conv,
                             hi * head_conv:(hi + 1) * head_conv].set(w.T)
                bcat.append(b.T)
            fused.append((wbd.astype(weight_dtype),
                          jnp.concatenate(bcat, axis=0).astype(jnp.float32)))
        cin_final = nh * head_conv
    else:
        cin_final = params[names[0]][-1][0].shape[0]

    wf = jnp.zeros((cpad, cin_final), jnp.float32)
    bf = jnp.zeros((cpad, 1), jnp.float32)
    for hi, n in enumerate(names):
        w, b = params[n][-1]                      # [c_in, classes], [1, classes]
        o, c = offsets[n]
        if n_hidden >= 1:
            wf = wf.at[o:o + c, hi * head_conv:(hi + 1) * head_conv].set(w.T)
        else:
            wf = wf.at[o:o + c, :].set(w.T)
        bf = bf.at[o:o + c, :].set(b.T)
    fused.append((wf.astype(weight_dtype), bf))
    return fused, offsets, cpad, n_hidden


# ----------------------------------------------------------------------------
# Tile selection + forward wrapper: NCHW in, dict of NCHW outputs
# ----------------------------------------------------------------------------
def _pick_pixel_tile(hw, batch, per_px_bytes, vmem_budget, target=4096):
    cap = max(128, (vmem_budget // max(per_px_bytes, 1)) // 128 * 128)
    tp = min(target, cap)
    if tp >= hw:
        return hw                               # single full-extent tile
    tp = max(128, (tp // 128) * 128)
    # Prefer an exact divisor of hw (multiple of 128) to avoid ragged tiles.
    if hw % 128 == 0:
        while tp > 128 and hw % tp != 0:
            tp -= 128
    # Keep >= ~8 grid steps when possible so both v7x TensorCores get
    # multiple pipelined iterations.
    while tp > 128 and batch * ((hw + tp - 1) // tp) < 8:
        nt = max(128, ((tp // 2) // 128) * 128)
        if nt == tp or (hw % 128 == 0 and hw % nt != 0):
            break
        tp = nt
    return tp


def separate_head_forward(x_nchw, fused, *, tp_target=4096,
                          out_dtype=jnp.bfloat16, vmem_budget=40 << 20):
    fused_layers, offsets, cpad, n_hidden = fused
    B, C, H, W = x_nchw.shape
    HW = H * W
    # Free metadata reshape: the NCHW map stays in HBM exactly as produced.
    x3 = x_nchw.reshape(B, C, HW)

    hidden_w = fused_layers[0][0].shape[0] if n_hidden >= 1 else 0
    out_bytes = jnp.dtype(out_dtype).itemsize
    # Double-buffered x + out blocks, bf16 hidden + f32 accumulators.
    per_px = (C * x_nchw.dtype.itemsize * 2 + cpad * out_bytes * 2
              + hidden_w * 6 + cpad * 4)
    tp = _pick_pixel_tile(HW, B, per_px, vmem_budget, tp_target)

    w_bytes = sum(w.size * w.dtype.itemsize + b.size * b.dtype.itemsize
                  for (w, b) in fused_layers)
    vmem_limit = min(64 << 20,
                     max(32 << 20, per_px * tp + 2 * w_bytes + (8 << 20)))

    y3 = _run_fused(x3, fused_layers, cpad, n_hidden, tp, out_dtype, vmem_limit)

    # Channels-major output: each head is a contiguous row slice, reshape free.
    out = {}
    for name, (off, c) in offsets.items():
        out[name] = y3[:, off:off + c, :].reshape(B, c, H, W)
    return out


# ----------------------------------------------------------------------------
# Pure-JAX f32 reference (unfused params) for a sanity check
# ----------------------------------------------------------------------------
def reference_forward(x_nchw, params, heads):
    B, C, H, W = x_nchw.shape
    x2d = jnp.transpose(x_nchw, (0, 2, 3, 1)).reshape(B * H * W, C)
    out = {}
    for head, (classes, _nc) in heads.items():
        h = x2d
        layers = params[head]
        for (w, b) in layers[:-1]:
            h = jnp.maximum(h @ w + b, 0.0)
        wf, bf = layers[-1]
        y = h @ wf + bf
        out[head] = jnp.transpose(y.reshape(B, H, W, classes), (0, 3, 1, 2))
    return out


if __name__ == "__main__":
    # Small shapes consistent with the module (real model: in=512, H=W=128).
    B, C_in, H, W = 2, 32, 16, 16
    head_conv = 32
    # CenterHead-style heads: {name: (classes, num_conv)}
    heads = {
        "reg": (2, 2),
        "height": (1, 2),
        "dim": (3, 2),
        "rot": (2, 2),
        "vel": (2, 2),
        "heatmap": (4, 2),
    }

    key = jax.random.PRNGKey(0)
    kx, kp = jax.random.split(key)
    x = jax.random.normal(kx, (B, C_in, H, W), jnp.float32)

    params = init_separate_head_params(kp, C_in, heads, head_conv=head_conv)
    fused = fuse_head_params(params, heads, head_conv)

    out = separate_head_forward(x, fused)
    out = jax.tree_util.tree_map(jax.block_until_ready, out)

    ref = reference_forward(x, params, heads)
    for name in heads:
        assert out[name].shape == (B, heads[name][0], H, W), name
        # bf16 weights/activations/output with f32 accumulation -> loose tol.
        assert jnp.allclose(out[name].astype(jnp.float32), ref[name],
                            atol=5e-2, rtol=5e-2), name

    print("KERNEL_OK")
</pallas_src>

<mosaic_0001>
module attributes {stable_mosaic.version = 11 : i64} {
  func.func @kernel(%arg0: i32, %arg1: i32, %arg2: memref<1x32x256xf32, #tpu.memory_space<vmem>>, %arg3: memref<192x32xbf16, #tpu.memory_space<vmem>>, %arg4: memref<192x1xf32, #tpu.memory_space<vmem>>, %arg5: memref<128x192xbf16, #tpu.memory_space<vmem>>, %arg6: memref<128x1xf32, #tpu.memory_space<vmem>>, %arg7: memref<1x128x256xbf16, #tpu.memory_space<vmem>>) attributes {dimension_semantics = [#tpu.dimension_semantics<parallel>, #tpu.dimension_semantics<parallel>], iteration_bounds = array<i64: 2, 1>, scalar_prefetch = 0 : i64, scratch_operands = 0 : i64, tpu.core_type = #tpu.core_type<tc>, window_params = [{transform_indices = @transform_0, window_bounds = array<i64: 1, 32, 256>}, {pipeline_mode = #tpu.pipeline_mode<synchronous>, transform_indices = @transform_1, window_bounds = array<i64: 192, 32>}, {pipeline_mode = #tpu.pipeline_mode<synchronous>, transform_indices = @transform_2, window_bounds = array<i64: 192, 1>}, {pipeline_mode = #tpu.pipeline_mode<synchronous>, transform_indices = @transform_3, window_bounds = array<i64: 128, 192>}, {pipeline_mode = #tpu.pipeline_mode<synchronous>, transform_indices = @transform_4, window_bounds = array<i64: 128, 1>}, {transform_indices = @transform_5, window_bounds = array<i64: 1, 128, 256>}]} {
    %c0 = arith.constant 0 : index
    %c0_0 = arith.constant 0 : index
    %c0_1 = arith.constant 0 : index
    %0 = vector.load %arg2[%c0, %c0_0, %c0_1] : memref<1x32x256xf32, #tpu.memory_space<vmem>>, vector<1x32x256xf32>
    %1 = vector.shape_cast %0 : vector<1x32x256xf32> to vector<32x256xf32>
    %2 = arith.truncf %1 : vector<32x256xf32> to vector<32x256xbf16>
    %c0_2 = arith.constant 0 : index
    %c0_3 = arith.constant 0 : index
    %3 = vector.load %arg3[%c0_2, %c0_3] : memref<192x32xbf16, #tpu.memory_space<vmem>>, vector<192x32xbf16>
    %c0_4 = arith.constant 0 : index
    %c0_5 = arith.constant 0 : index
    %4 = vector.load %arg4[%c0_4, %c0_5] : memref<192x1xf32, #tpu.memory_space<vmem>>, vector<192x1xf32>
    %cst = arith.constant dense<0.000000e+00> : vector<192x256xf32>
    %5 = tpu.matmul %3, %2, %cst {dimension_numbers = #tpu.dot_dimension_numbers<[1], [0], [0], [1], [0, 0, 1, 1], [], []>} : vector<192x32xbf16>, vector<32x256xbf16>, vector<192x256xf32> -> vector<192x256xf32>
    %6 = vector.broadcast %4 : vector<192x1xf32> to vector<192x256xf32>
    %7 = arith.addf %5, %6 : vector<192x256xf32>
    %cst_6 = arith.constant 0.000000e+00 : f32
    %8 = vector.broadcast %cst_6 : f32 to vector<192x256xf32>
    %9 = arith.maximumf %7, %8 : vector<192x256xf32>
    %10 = arith.truncf %9 : vector<192x256xf32> to vector<192x256xbf16>
    %c0_7 = arith.constant 0 : index
    %c0_8 = arith.constant 0 : index
    %11 = vector.load %arg5[%c0_7, %c0_8] : memref<128x192xbf16, #tpu.memory_space<vmem>>, vector<128x192xbf16>
    %c0_9 = arith.constant 0 : index
    %c0_10 = arith.constant 0 : index
    %12 = vector.load %arg6[%c0_9, %c0_10] : memref<128x1xf32, #tpu.memory_space<vmem>>, vector<128x1xf32>
    %cst_11 = arith.constant dense<0.000000e+00> : vector<128x256xf32>
    %13 = tpu.matmul %11, %10, %cst_11 {dimension_numbers = #tpu.dot_dimension_numbers<[1], [0], [0], [1], [0, 0, 1, 1], [], []>} : vector<128x192xbf16>, vector<192x256xbf16>, vector<128x256xf32> -> vector<128x256xf32>
    %14 = vector.broadcast %12 : vector<128x1xf32> to vector<128x256xf32>
    %15 = arith.addf %13, %14 : vector<128x256xf32>
    %16 = arith.truncf %15 : vector<128x256xf32> to vector<128x256xbf16>
    %c0_12 = arith.constant 0 : index
    %c0_13 = arith.constant 0 : index
    %c0_14 = arith.constant 0 : index
    %17 = vector.load %arg7[%c0_12, %c0_13, %c0_14] : memref<1x128x256xbf16, #tpu.memory_space<vmem>>, vector<1x128x256xbf16>
    %18 = vector.shape_cast %17 : vector<1x128x256xbf16> to vector<128x256xbf16>
    %19 = vector.shape_cast %16 : vector<128x256xbf16> to vector<1x128x256xbf16>
    tpu.vector_store %arg7[%c0_12, %c0_13, %c0_14], %19 {strides = array<i32>} : memref<1x128x256xbf16, #tpu.memory_space<vmem>>, vector<1x128x256xbf16>,
    return
  }
  func.func @transform_0(%arg0: i32, %arg1: i32) -> (i32, i32, i32) {
    %c0_i32 = arith.constant 0 : i32
    %c0_i32_0 = arith.constant 0 : i32
    return %arg0, %c0_i32, %arg1 : i32, i32, i32
  }
  func.func @transform_1(%arg0: i32, %arg1: i32) -> (i32, i32) {
    %c0_i32 = arith.constant 0 : i32
    %c0_i32_0 = arith.constant 0 : i32
    %c0_i32_1 = arith.constant 0 : i32
    return %c0_i32, %c0_i32_0 : i32, i32
  }
  func.func @transform_2(%arg0: i32, %arg1: i32) -> (i32, i32) {
    %c0_i32 = arith.constant 0 : i32
    %c0_i32_0 = arith.constant 0 : i32
    %c0_i32_1 = arith.constant 0 : i32
    return %c0_i32, %c0_i32_0 : i32, i32
  }
  func.func @transform_3(%arg0: i32, %arg1: i32) -> (i32, i32) {
    %c0_i32 = arith.constant 0 : i32
    %c0_i32_0 = arith.constant 0 : i32
    %c0_i32_1 = arith.constant 0 : i32
    return %c0_i32, %c0_i32_0 : i32, i32
  }
  func.func @transform_4(%arg0: i32, %arg1: i32) -> (i32, i32) {
    %c0_i32 = arith.constant 0 : i32
    %c0_i32_0 = arith.constant 0 : i32
    %c0_i32_1 = arith.constant 0 : i32
    return %c0_i32, %c0_i32_0 : i32, i32
  }
  func.func @transform_5(%arg0: i32, %arg1: i32) -> (i32, i32, i32) {
    %c0_i32 = arith.constant 0 : i32
    %c0_i32_0 = arith.constant 0 : i32
    return %arg0, %c0_i32, %arg1 : i32, i32, i32
  }
}

</mosaic_0001>

<llo_original>
// kernel: tpu_custom_call.1
$region0: #{tpu_custom_call.1}
  #allocation0 [shape = 'u32[]', space=smem, size = 0x4, offset = 0x4, fixed_abs, tag = 'smem constant byte address 0x4 - core index']
  #allocation1 [shape = 'u32[144,128]{1,0:T(1,128)}', space=vmem, size = 0x12000, scoped, tag = 'internal scratch']
  %s0 = inlined_call_operand.vmem [shape: f32[2,32,256], index: 0, kind: input, shape index: {}]
  %s1 = inlined_call_operand.vmem [shape: bf16[192,32], index: 1, kind: input, shape index: {}]
  %s2 = inlined_call_operand.vmem [shape: f32[192,1], index: 2, kind: input, shape index: {}]
  %s3 = inlined_call_operand.vmem [shape: bf16[128,192], index: 3, kind: input, shape index: {}]
  %s4 = inlined_call_operand.vmem [shape: f32[128,1], index: 4, kind: input, shape index: {}]
  %s5 = inlined_call_operand.hbm [shape: bf16[2,128,256], index: 5, kind: output, shape index: {}]
  %s6 = sld [smem:[#allocation0]]
  $region53: #{tpu_custom_call.1} parent=0
    _
  %s8 = ssub.s32 1, %s6
  %s9 = scalar_select 0, %s8, %s6
  $region1: #{tpu_custom_call.1} parent=0
    #allocation2 [shape = 'u8[131072]{0}', space=vmem, size = 0x20000, scoped, tag = 'output window, operand 0']
    #allocation3 [shape = 's32[2]{0}', space=sflag, size = 0x8, scoped, tag = 'scoped memory for tpu_custom_call.1']
    %10 = vsyncpa [#allocation3], 0
    %s11 = scalar_lea.sflag [#allocation3], 1
    %12 = vsyncpa %s11, 0
    loop: start=0, step=1, limit=4
    $region2: #{tpu_custom_call.1} parent=1 // loop_pre_header
      _
    $region3: #{tpu_custom_call.1} parent=1 // loop_header
      %s14 = sphi 0, %s18
      %p15 = scmp.ge.s32.totalorder %s14, 4
      %s21 = sphi 0, %s33
      %s22 = sphi 0, %s29
      %s23 = sphi 0, %s21
      %s24 = sphi 0, %s22
      %s25 = sphi 0, %s23
      %s26 = sphi 0, %s24
      %s38 = sphi 0, %s40
      %s41 = sphi 0, %s38
      %s42 = sphi 0, %s41
      %s58 = sphi 0, %s42
      %s62 = sphi 0, %s62
      %s64 = sphi 0, %s62
      %s65 = sphi 0, %s64
      %s79 = sphi 0, %s65
      %s83 = sphi 0, %s83
      %s85 = sphi 0, %s83
      %s86 = sphi 0, %s85
      %s100 = sphi 0, %s86
      %s104 = sphi 0, %s104
      %s106 = sphi 0, %s104
      %s107 = sphi 0, %s106
      %s121 = sphi 0, %s107
      %s125 = sphi 0, %s125
      %s127 = sphi 0, %s125
      %s128 = sphi 0, %s127
      %s142 = sphi 0, %s128
      %s150 = sphi 0, %s152
      %s153 = sphi 0, %s150
      %s154 = sphi 0, %s153
      %s170 = sphi 0, %s154
    $region4: #{tpu_custom_call.1} parent=1 // loop_header_branch
      %17 = sbr.rel (%p15) target = $region8
    $region5: #{tpu_custom_call.1} parent=1 // loop_body
      %s19 = ssub.s32 %s14, 1
      %s20 = ssub.s32 %s14, 2
      %s27 = sadd.s32 1, %s22
      %p28 = scmp.ge.s32.totalorder %s27, 1
      %s29 = scalar_select %p28, 0, %s27
      %s30 = sadd.s32 1, %s21
      %s31 = scalar_select %p28, %s30, %s21
      %p32 = scmp.ge.s32.totalorder %s31, 2
      %s33 = scalar_select %p32, 0, %s31
      %s34 = ssub.s32 %s21, %s33
      %s35 = ssub.s32 %s22, %s29
      %s36 = sor.u32 %s34, %s35
      %p37 = scmp.eq.s32.totalorder %s36, 0
      %s39 = sadd.s32 %s38, 1
      %s40 = scalar_select %p37, %s38, %s39
      %p43 = pneg %p37
      %p44 = scmp.eq.s32.totalorder %s14, 1
      %p45 = por %p43, %p44
      %p46 = scmp.ne.s32.totalorder %s38, %s41
      %p47 = scmp.eq.s32.totalorder %s14, 0
      %p48 = por %p46, %p47
      %p49 = scmp.ne.s32.totalorder %s38, %s41
      %p50 = scmp.eq.s32.totalorder %s19, 1
      %p51 = por %p49, %p50
      %p52 = scmp.ne.s32.totalorder %s41, %s42
      %p53 = scmp.eq.s32.totalorder %s19, 0
      %p54 = por %p52, %p53
      %p55 = scmp.ne.s32.totalorder %s41, %s42
      %p56 = scmp.eq.s32.totalorder %s20, 1
      %p57 = por %p55, %p56
      %p59 = scmp.ne.s32.totalorder %s42, %s58
      %p60 = scmp.eq.s32.totalorder %s20, 0
      %p61 = por %p59, %p60
      %s63 = sadd.s32 %s62, 1
      %p66 = scmp.eq.s32.totalorder %s14, 1
      %p67 = scmp.ne.s32.totalorder %s62, %s64
      %p68 = scmp.eq.s32.totalorder %s14, 0
      %p69 = por %p67, %p68
      %p70 = scmp.ne.s32.totalorder %s62, %s64
      %p71 = scmp.eq.s32.totalorder %s19, 1
      %p72 = por %p70, %p71
      %p73 = scmp.ne.s32.totalorder %s64, %s65
      %p74 = scmp.eq.s32.totalorder %s19, 0
      %p75 = por %p73, %p74
      %p76 = scmp.ne.s32.totalorder %s64, %s65
      %p77 = scmp.eq.s32.totalorder %s20, 1
      %p78 = por %p76, %p77
      %p80 = scmp.ne.s32.totalorder %s65, %s79
      %p81 = scmp.eq.s32.totalorder %s20, 0
      %p82 = por %p80, %p81
      %s84 = sadd.s32 %s83, 1
      %p87 = scmp.eq.s32.totalorder %s14, 1
      %p88 = scmp.ne.s32.totalorder %s83, %s85
      %p89 = scmp.eq.s32.totalorder %s14, 0
      %p90 = por %p88, %p89
      %p91 = scmp.ne.s32.totalorder %s83, %s85
      %p92 = scmp.eq.s32.totalorder %s19, 1
      %p93 = por %p91, %p92
      %p94 = scmp.ne.s32.totalorder %s85, %s86
      %p95 = scmp.eq.s32.totalorder %s19, 0
      %p96 = por %p94, %p95
      %p97 = scmp.ne.s32.totalorder %s85, %s86
      %p98 = scmp.eq.s32.totalorder %s20, 1
      %p99 = por %p97, %p98
      %p101 = scmp.ne.s32.totalorder %s86, %s100
      %p102 = scmp.eq.s32.totalorder %s20, 0
      %p103 = por %p101, %p102
      %s105 = sadd.s32 %s104, 1
      %p108 = scmp.eq.s32.totalorder %s14, 1
      %p109 = scmp.ne.s32.totalorder %s104, %s106
      %p110 = scmp.eq.s32.totalorder %s14, 0
      %p111 = por %p109, %p110
      %p112 = scmp.ne.s32.totalorder %s104, %s106
      %p113 = scmp.eq.s32.totalorder %s19, 1
      %p114 = por %p112, %p113
      %p115 = scmp.ne.s32.totalorder %s106, %s107
      %p116 = scmp.eq.s32.totalorder %s19, 0
      %p117 = por %p115, %p116
      %p118 = scmp.ne.s32.totalorder %s106, %s107
      %p119 = scmp.eq.s32.totalorder %s20, 1
      %p120 = por %p118, %p119
      %p122 = scmp.ne.s32.totalorder %s107, %s121
      %p123 = scmp.eq.s32.totalorder %s20, 0
      %p124 = por %p122, %p123
      %s126 = sadd.s32 %s125, 1
      %p129 = scmp.eq.s32.totalorder %s14, 1
      %p130 = scmp.ne.s32.totalorder %s125, %s127
      %p131 = scmp.eq.s32.totalorder %s14, 0
      %p132 = por %p130, %p131
      %p133 = scmp.ne.s32.totalorder %s125, %s127
      %p134 = scmp.eq.s32.totalorder %s19, 1
      %p135 = por %p133, %p134
      %p136 = scmp.ne.s32.totalorder %s127, %s128
      %p137 = scmp.eq.s32.totalorder %s19, 0
      %p138 = por %p136, %p137
      %p139 = scmp.ne.s32.totalorder %s127, %s128
      %p140 = scmp.eq.s32.totalorder %s20, 1
      %p141 = por %p139, %p140
      %p143 = scmp.ne.s32.totalorder %s128, %s142
      %p144 = scmp.eq.s32.totalorder %s20, 0
      %p145 = por %p143, %p144
      %s146 = ssub.s32 %s21, %s33
      %s147 = ssub.s32 %s22, %s29
      %s148 = sor.u32 %s146, %s147
      %p149 = scmp.eq.s32.totalorder %s148, 0
      %s151 = sadd.s32 %s150, 1
      %s152 = scalar_select %p149, %s150, %s151
      %p155 = pneg %p149
      %p156 = scmp.eq.s32.totalorder %s14, 1
      %p157 = por %p155, %p156
      %p158 = scmp.ne.s32.totalorder %s150, %s153
      %p159 = scmp.eq.s32.totalorder %s14, 0
      %p160 = por %p158, %p159
      %p161 = scmp.ne.s32.totalorder %s150, %s153
      %p162 = scmp.eq.s32.totalorder %s19, 1
      %p163 = por %p161, %p162
      %p164 = scmp.ne.s32.totalorder %s153, %s154
      %p165 = scmp.eq.s32.totalorder %s19, 0
      %p166 = por %p164, %p165
      %p167 = scmp.ne.s32.totalorder %s153, %s154
      %p168 = scmp.eq.s32.totalorder %s20, 1
      %p169 = por %p167, %p168
      %p171 = scmp.ne.s32.totalorder %s154, %s170
      %p172 = scmp.eq.s32.totalorder %s20, 0
      %p173 = por %p171, %p172
      %p174 = scmp.le.s32.totalorder 1, %s14
      %p175 = scmp.lt.s32.totalorder %s14, 3
      %p176 = pnand %p174, %p175
      %p177 = pneg %p176
      // Predicated region
      $region9: #{tpu_custom_call.1} parent=5 // pred_check
        _
      $region10: #{tpu_custom_call.1} parent=5 // pred_check_branch
        %179 = sbr.rel (%p176) target = $region12
      $region11: #{tpu_custom_call.1} parent=5 // pred_region
        %s180 = ssub.s32 %s14, 1
        // Predicated region
        $region13: #{tpu_custom_call.1} parent=11 // pred_check
          %p181 = pneg %p75
        $region14: #{tpu_custom_call.1} parent=11 // pred_check_branch
          %183 = sbr.rel (%p181) target = $region16
        $region15: #{tpu_custom_call.1} parent=11 // pred_region
          _
        $region16: #{tpu_custom_call.1} parent=11 // pred_fallthru
          _
        // Predicated region
        $region17: #{tpu_custom_call.1} parent=11 // pred_check
          %p184 = pneg %p96
        $region18: #{tpu_custom_call.1} parent=11 // pred_check_branch
          %186 = sbr.rel (%p184) target = $region20
        $region19: #{tpu_custom_call.1} parent=11 // pred_region
          _
        $region20: #{tpu_custom_call.1} parent=11 // pred_fallthru
          _
        // Predicated region
        $region21: #{tpu_custom_call.1} parent=11 // pred_check
          %p187 = pneg %p117
        $region22: #{tpu_custom_call.1} parent=11 // pred_check_branch
          %189 = sbr.rel (%p187) target = $region24
        $region23: #{tpu_custom_call.1} parent=11 // pred_region
          _
        $region24: #{tpu_custom_call.1} parent=11 // pred_fallthru
          _
        // Predicated region
        $region25: #{tpu_custom_call.1} parent=11 // pred_check
          %p190 = pneg %p138
        $region26: #{tpu_custom_call.1} parent=11 // pred_check_branch
          %192 = sbr.rel (%p190) target = $region28
        $region27: #{tpu_custom_call.1} parent=11 // pred_region
          _
        $region28: #{tpu_custom_call.1} parent=11 // pred_fallthru
          _
      $region12: #{tpu_custom_call.1} parent=5 // pred_fallthru
        _
      %p193 = scmp.lt.s32.totalorder %s14, 2
      // Predicated region
      $region29: #{tpu_custom_call.1} parent=5 // pred_check
        %p194 = pneg %p193
      $region30: #{tpu_custom_call.1} parent=5 // pred_check_branch
        %196 = sbr.rel (%p194) target = $region32
      $region31: #{tpu_custom_call.1} parent=5 // pred_region
        // Predicated region
        $region33: #{tpu_custom_call.1} parent=31 // pred_check
          %p197 = pneg %p48
        $region34: #{tpu_custom_call.1} parent=31 // pred_check_branch
          %199 = sbr.rel (%p197) target = $region36
        $region35: #{tpu_custom_call.1} parent=31 // pred_region
          %s200 = smul.u32 2, %s22
          %p201 = scmp.lt.s32.totalorder %s21, 1
          %s202 = scalar_select %p201, %s21, 1
          %p203 = scmp.lt.s32.totalorder %s200, 1
          %s204 = scalar_select %p203, %s200, 1
          %s205 = smul.addr %s202, 8
          %s206 = sadd.s32 %s204, %s205
          %s207 = smul.addr %s206, 8
          %s208 = scalar_lea.vmem %s0, %s207
          %s209 = smul.u32 2, %s22
        $region36: #{tpu_custom_call.1} parent=31 // pred_fallthru
          _
      $region32: #{tpu_custom_call.1} parent=5 // pred_fallthru
        _
      %p210 = scmp.le.s32.totalorder 1, %s14
      %p211 = scmp.lt.s32.totalorder %s14, 3
      %p212 = pnand %p210, %p211
      %p213 = pneg %p212
      // Predicated region
      $region37: #{tpu_custom_call.1} parent=5 // pred_check
        _
      $region38: #{tpu_custom_call.1} parent=5 // pred_check_branch
        %215 = sbr.rel (%p212) target = $region40
      $region39: #{tpu_custom_call.1} parent=5 // pred_region
        %s216 = ssub.s32 %s14, 1
        %s217 = smul.u32 2, %s24
        %p218 = scmp.lt.s32.totalorder %s23, 1
        %s219 = scalar_select %p218, %s23, 1
        %p220 = scmp.lt.s32.totalorder %s217, 1
        %s221 = scalar_select %p220, %s217, 1
        %s222 = smul.addr %s219, 8
        %s223 = sadd.s32 %s221, %s222
        %s224 = smul.addr %s223, 8
        %s225 = scalar_lea.vmem %s0, %s224
        %p226 = pneg %p54
        %p227 = pneg %p51
        %p228 = pneg %p75
        %p229 = pneg %p72
        %p230 = pneg %p96
        %p231 = pneg %p93
        %p232 = pneg %p117
        %p233 = pneg %p114
        %p234 = pneg %p138
        %p235 = pneg %p135
        %p236 = pneg %p166
        %p237 = pneg %p163
        %s238 = sand.u32 %s153, 1
        %s239 = scalar_lea.sflag [#allocation3], %s238
        %s240 = sand.u32 %s153, 1
        %s241 = smul.addr %s240, 128
        %s242 = scalar_lea.vmem [#allocation2], %s241
        %s243 = smul.u32 2, %s24
        %p244 = scmp.lt.s32.totalorder %s23, 1
        %s245 = scalar_select %p244, %s23, 1
        %p246 = scmp.lt.s32.totalorder %s243, 1
        %s247 = scalar_select %p246, %s243, 1
        %s248 = smul.addr %s245, 8
        %s249 = sadd.s32 %s247, %s248
        %s250 = smul.addr %s249, 8
        %s251 = scalar_lea.vmem %s0, %s250
        %s252 = smul.u32 2, %s24
        %s253 = smul.u32 2, %s24
        %v255 = vld [vmem:[%s251] sm:$0xff]
        %v256 = vld [vmem:[%s251 + $0x8] sm:$0xff]
        %v257 = vld [vmem:[%s251 + $0x10] sm:$0xff]
        %v258 = vld [vmem:[%s251 + $0x18] sm:$0xff]
        %v259 = vld [vmem:[%s251 + $0x20] sm:$0xff]
        %v260 = vld [vmem:[%s251 + $0x28] sm:$0xff]
        %v261 = vld [vmem:[%s251 + $0x30] sm:$0xff]
        %v262 = vld [vmem:[%s251 + $0x38] sm:$0xff]
        %v263 = vpack.c.bf16 %v257, %v255
        %v264 = vpack.c.bf16 %v258, %v256
        %v265 = vpack.c.bf16 %v261, %v259
        %v266 = vpack.c.bf16 %v262, %v260
        %v267 = vld [vmem:[%s1] sm:$0xf]
        %v268 = vld [vmem:[%s1 + $0x4] sm:$0xf]
        %v269 = vld [vmem:[%s1 + $0x8] sm:$0xf]
        %v270 = vld [vmem:[%s1 + $0xc] sm:$0xf]
        %v271 = vld [vmem:[%s1 + $0x10] sm:$0xf]
        %v272 = vld [vmem:[%s1 + $0x14] sm:$0xf]
        %v273 = vld [vmem:[%s1 + $0x18] sm:$0xf]
        %v274 = vld [vmem:[%s1 + $0x1c] sm:$0xf]
        %v275 = vld [vmem:[%s1 + $0x20] sm:$0xf]
        %v276 = vld [vmem:[%s1 + $0x24] sm:$0xf]
        %v277 = vld [vmem:[%s1 + $0x28] sm:$0xf]
        %v278 = vld [vmem:[%s1 + $0x2c] sm:$0xf]
        %v279 = vld [vmem:[%s1 + $0x30] sm:$0xf]
        %v280 = vld [vmem:[%s1 + $0x34] sm:$0xf]
        %v281 = vld [vmem:[%s1 + $0x38] sm:$0xf]
        %v282 = vld [vmem:[%s1 + $0x3c] sm:$0xf]
        %v283 = vld [vmem:[%s1 + $0x40] sm:$0xf]
        %v284 = vld [vmem:[%s1 + $0x44] sm:$0xf]
        %v285 = vld [vmem:[%s1 + $0x48] sm:$0xf]
        %v286 = vld [vmem:[%s1 + $0x4c] sm:$0xf]
        %v287 = vld [vmem:[%s1 + $0x50] sm:$0xf]
        %v288 = vld [vmem:[%s1 + $0x54] sm:$0xf]
        %v289 = vld [vmem:[%s1 + $0x58] sm:$0xf]
        %v290 = vld [vmem:[%s1 + $0x5c] sm:$0xf]
        %v291 = vld [vmem:[%s2] sm:$0xff]
        %v292 = vld [vmem:[%s2 + $0x8] sm:$0xff]
        %v293 = vld [vmem:[%s2 + $0x10] sm:$0xff]
        %v294 = vld [vmem:[%s2 + $0x18] sm:$0xff]
        %v295 = vld [vmem:[%s2 + $0x20] sm:$0xff]
        %v296 = vld [vmem:[%s2 + $0x28] sm:$0xff]
        %v297 = vld [vmem:[%s2 + $0x30] sm:$0xff]
        %v298 = vld [vmem:[%s2 + $0x38] sm:$0xff]
        %v299 = vld [vmem:[%s2 + $0x40] sm:$0xff]
        %v300 = vld [vmem:[%s2 + $0x48] sm:$0xff]
        %v301 = vld [vmem:[%s2 + $0x50] sm:$0xff]
        %v302 = vld [vmem:[%s2 + $0x58] sm:$0xff]
        %v303 = vld [vmem:[%s2 + $0x60] sm:$0xff]
        %v304 = vld [vmem:[%s2 + $0x68] sm:$0xff]
        %v305 = vld [vmem:[%s2 + $0x70] sm:$0xff]
        %v306 = vld [vmem:[%s2 + $0x78] sm:$0xff]
        %v307 = vld [vmem:[%s2 + $0x80] sm:$0xff]
        %v308 = vld [vmem:[%s2 + $0x88] sm:$0xff]
        %v309 = vld [vmem:[%s2 + $0x90] sm:$0xff]
        %v310 = vld [vmem:[%s2 + $0x98] sm:$0xff]
        %v311 = vld [vmem:[%s2 + $0xa0] sm:$0xff]
        %v312 = vld [vmem:[%s2 + $0xa8] sm:$0xff]
        %v313 = vld [vmem:[%s2 + $0xb0] sm:$0xff]
        %v314 = vld [vmem:[%s2 + $0xb8] sm:$0xff]
        %316 = vset.pattern.permute.xlu0 0
        %317 = vperm.xlu0 %316, %v291
        %v318 = vpop.permute.xlu0 %317
        %321 = vset.pattern.permute.xlu0 0
        %322 = vperm.xlu0 %321, %v292
        %v323 = vpop.permute.xlu0 %322
        %326 = vset.pattern.permute.xlu0 0
        %327 = vperm.xlu0 %326, %v293
        %v328 = vpop.permute.xlu0 %327
        %331 = vset.pattern.permute.xlu0 0
        %332 = vperm.xlu0 %331, %v294
        %v333 = vpop.permute.xlu0 %332
        %336 = vset.pattern.permute.xlu0 0
        %337 = vperm.xlu0 %336, %v295
        %v338 = vpop.permute.xlu0 %337
        %341 = vset.pattern.permute.xlu0 0
        %342 = vperm.xlu0 %341, %v296
        %v343 = vpop.permute.xlu0 %342
        %346 = vset.pattern.permute.xlu0 0
        %347 = vperm.xlu0 %346, %v297
        %v348 = vpop.permute.xlu0 %347
        %351 = vset.pattern.permute.xlu0 0
        %352 = vperm.xlu0 %351, %v298
        %v353 = vpop.permute.xlu0 %352
        %356 = vset.pattern.permute.xlu0 0
        %357 = vperm.xlu0 %356, %v299
        %v358 = vpop.permute.xlu0 %357
        %361 = vset.pattern.permute.xlu0 0
        %362 = vperm.xlu0 %361, %v300
        %v363 = vpop.permute.xlu0 %362
        %366 = vset.pattern.permute.xlu0 0
        %367 = vperm.xlu0 %366, %v301
        %v368 = vpop.permute.xlu0 %367
        %371 = vset.pattern.permute.xlu0 0
        %372 = vperm.xlu0 %371, %v302
        %v373 = vpop.permute.xlu0 %372
        %376 = vset.pattern.permute.xlu0 0
        %377 = vperm.xlu0 %376, %v303
        %v378 = vpop.permute.xlu0 %377
        %381 = vset.pattern.permute.xlu0 0
        %382 = vperm.xlu0 %381, %v304
        %v383 = vpop.permute.xlu0 %382
        %386 = vset.pattern.permute.xlu0 0
        %387 = vperm.xlu0 %386, %v305
        %v388 = vpop.permute.xlu0 %387
        %391 = vset.pattern.permute.xlu0 0
        %392 = vperm.xlu0 %391, %v306
        %v393 = vpop.permute.xlu0 %392
        %396 = vset.pattern.permute.xlu0 0
        %397 = vperm.xlu0 %396, %v307
        %v398 = vpop.permute.xlu0 %397
        %401 = vset.pattern.permute.xlu0 0
        %402 = vperm.xlu0 %401, %v308
        %v403 = vpop.permute.xlu0 %402
        %406 = vset.pattern.permute.xlu0 0
        %407 = vperm.xlu0 %406, %v309
        %v408 = vpop.permute.xlu0 %407
        %411 = vset.pattern.permute.xlu0 0
        %412 = vperm.xlu0 %411, %v310
        %v413 = vpop.permute.xlu0 %412
        %416 = vset.pattern.permute.xlu0 0
        %417 = vperm.xlu0 %416, %v311
        %v418 = vpop.permute.xlu0 %417
        %421 = vset.pattern.permute.xlu0 0
        %422 = vperm.xlu0 %421, %v312
        %v423 = vpop.permute.xlu0 %422
        %426 = vset.pattern.permute.xlu0 0
        %427 = vperm.xlu0 %426, %v313
        %v428 = vpop.permute.xlu0 %427
        %431 = vset.pattern.permute.xlu0 0
        %432 = vperm.xlu0 %431, %v314
        %v433 = vpop.permute.xlu0 %432
        %v459 = vunpack.c.l.b16 %v267
        %v460 = vunpack.c.l.b16 %v268
        %v461 = vunpack.c.l.b16 %v269
        %v462 = vunpack.c.l.b16 %v270
        %v463 = vunpack.c.l.b16 %v271
        %v464 = vunpack.c.l.b16 %v272
        %v465 = vunpack.c.l.b16 %v273
        %v466 = vunpack.c.l.b16 %v274
        %v467 = vunpack.c.l.b16 %v275
        %v468 = vunpack.c.l.b16 %v276
        %v469 = vunpack.c.l.b16 %v277
        %v470 = vunpack.c.l.b16 %v278
        %v471 = vunpack.c.l.b16 %v279
        %v472 = vunpack.c.l.b16 %v280
        %v473 = vunpack.c.l.b16 %v281
        %v474 = vunpack.c.l.b16 %v282
        %v475 = vunpack.c.l.b16 %v283
        %v476 = vunpack.c.l.b16 %v284
        %v477 = vunpack.c.l.b16 %v285
        %v478 = vunpack.c.l.b16 %v286
        %v479 = vunpack.c.l.b16 %v287
        %v480 = vunpack.c.l.b16 %v288
        %v481 = vunpack.c.l.b16 %v289
        %v482 = vunpack.c.l.b16 %v290
        %v483 = vpack.c.b16 %v460, %v459
        %v484 = vpack.c.b16 %v462, %v461
        %v485 = vpack.c.b16 %v464, %v463
        %v486 = vpack.c.b16 %v466, %v465
        %v487 = vpack.c.b16 %v468, %v467
        %v488 = vpack.c.b16 %v470, %v469
        %v489 = vpack.c.b16 %v472, %v471
        %v490 = vpack.c.b16 %v474, %v473
        %v491 = vpack.c.b16 %v476, %v475
        %v492 = vpack.c.b16 %v478, %v477
        %v493 = vpack.c.b16 %v480, %v479
        %v494 = vpack.c.b16 %v482, %v481
        %vm495 = vcmask 261120
        %v497 = vsel %vm495, %v483, 0
        %v500 = vsel %vm495, %v484, 0
        %v503 = vsel %vm495, %v485, 0
        %v506 = vsel %vm495, %v486, 0
        %v509 = vsel %vm495, %v487, 0
        %v512 = vsel %vm495, %v488, 0
        %v515 = vsel %vm495, %v489, 0
        %v518 = vsel %vm495, %v490, 0
        %v521 = vsel %vm495, %v491, 0
        %v524 = vsel %vm495, %v492, 0
        %v527 = vsel %vm495, %v493, 0
        %v530 = vsel %vm495, %v494, 0
        %532 = vmatprep.subr.bf16.mxu0 %v264
        %533 = vmatpush1.bf16.msra.mxu0 %v263
        %534 = vmatprep.subr.bf16.mxu0 %v266
        %535 = vmatpush1.bf16.msra.mxu0 %v265
        %536 = vmatprep.subr.bf16.mxu0 0
        %537 = vmatpush1.bf16.msra.mxu0 0
        %538 = vmatprep.subr.bf16.mxu0 0
        %539 = vmatpush1.bf16.msra.mxu0 0
        %540 = vmatprep.subr.bf16.mxu0 0
        %541 = vmatpush1.bf16.msra.mxu0 0
        %542 = vmatprep.subr.bf16.mxu0 0
        %543 = vmatpush1.bf16.msra.mxu0 0
        %544 = vmatprep.subr.bf16.mxu0 0
        %545 = vmatpush1.bf16.msra.mxu0 0
        %546 = vmatprep.subr.bf16.mxu0 0
        %547 = vmatpush1.bf16.msra.mxu0 0
        %548 = vmatprep.subr.bf16.mxu0 0
        %549 = vmatpush1.bf16.msra.mxu0 0
        %550 = vmatprep.subr.bf16.mxu0 0
        %551 = vmatpush1.bf16.msra.mxu0 0
        %552 = vmatprep.subr.bf16.mxu0 0
        %553 = vmatpush1.bf16.msra.mxu0 0
        %554 = vmatprep.subr.bf16.mxu0 0
        %555 = vmatpush1.bf16.msra.mxu0 0
        %556 = vmatprep.subr.bf16.mxu0 0
        %557 = vmatpush1.bf16.msra.mxu0 0
        %558 = vmatprep.subr.bf16.mxu0 0
        %559 = vmatpush1.bf16.msra.mxu0 0
        %560 = vmatprep.subr.bf16.mxu0 0
        %561 = vmatpush1.bf16.msra.mxu0 0
        %562 = vmatprep.subr.bf16.mxu0 0
        %563 = vmatpush1.bf16.msra.mxu0 0
        %564 = vmatprep.mubr.bf16.mxu0 0
        %565 = vmatmul.mubr.bf16.gmra.mrb[0].mxu0 %v497
        %v566 = vpop.f32.mrb[0].mxu0
        %v567 = vadd.f32 %v318, %v566
        %v568 = vpop.f32.mrb[0].mxu0
        %v569 = vadd.f32 %v318, %v568
        %v570 = vpop.f32.mrb[0].mxu0
        %v571 = vadd.f32 %v323, %v570
        %v572 = vpop.f32.mrb[0].mxu0
        %v573 = vadd.f32 %v323, %v572
        %574 = vmatprep.mubr.bf16.mxu0 0
        %575 = vmatmul.mubr.bf16.gmra.mrb[0].mxu0 %v500
        %v576 = vpop.f32.mrb[0].mxu0
        %v577 = vadd.f32 %v328, %v576
        %v578 = vpop.f32.mrb[0].mxu0
        %v579 = vadd.f32 %v328, %v578
        %v580 = vpop.f32.mrb[0].mxu0
        %v581 = vadd.f32 %v333, %v580
        %v582 = vpop.f32.mrb[0].mxu0
        %v583 = vadd.f32 %v333, %v582
        %584 = vmatprep.mubr.bf16.mxu0 0
        %585 = vmatmul.mubr.bf16.gmra.mrb[0].mxu0 %v503
        %v586 = vpop.f32.mrb[0].mxu0
        %v587 = vadd.f32 %v338, %v586
        %v588 = vpop.f32.mrb[0].mxu0
        %v589 = vadd.f32 %v338, %v588
        %v590 = vpop.f32.mrb[0].mxu0
        %v591 = vadd.f32 %v343, %v590
        %v592 = vpop.f32.mrb[0].mxu0
        %v593 = vadd.f32 %v343, %v592
        %594 = vmatprep.mubr.bf16.mxu0 0
        %595 = vmatmul.mubr.bf16.gmra.mrb[0].mxu0 %v506
        %v596 = vpop.f32.mrb[0].mxu0
        %v597 = vadd.f32 %v348, %v596
        %v598 = vpop.f32.mrb[0].mxu0
        %v599 = vadd.f32 %v348, %v598
        %v600 = vpop.f32.mrb[0].mxu0
        %v601 = vadd.f32 %v353, %v600
        %v602 = vpop.f32.mrb[0].mxu0
        %v603 = vadd.f32 %v353, %v602
        %604 = vmatprep.mubr.bf16.mxu0 0
        %605 = vmatmul.mubr.bf16.gmra.mrb[0].mxu0 %v509
        %v606 = vpop.f32.mrb[0].mxu0
        %v607 = vadd.f32 %v358, %v606
        %v608 = vpop.f32.mrb[0].mxu0
        %v609 = vadd.f32 %v358, %v608
        %v610 = vpop.f32.mrb[0].mxu0
        %v611 = vadd.f32 %v363, %v610
        %v612 = vpop.f32.mrb[0].mxu0
        %v613 = vadd.f32 %v363, %v612
        %614 = vmatprep.mubr.bf16.mxu0 0
        %615 = vmatmul.mubr.bf16.gmra.mrb[0].mxu0 %v512
        %v616 = vpop.f32.mrb[0].mxu0
        %v617 = vadd.f32 %v368, %v616
        %v618 = vpop.f32.mrb[0].mxu0
        %v619 = vadd.f32 %v368, %v618
        %v620 = vpop.f32.mrb[0].mxu0
        %v621 = vadd.f32 %v373, %v620
        %v622 = vpop.f32.mrb[0].mxu0
        %v623 = vadd.f32 %v373, %v622
        %624 = vmatprep.mubr.bf16.mxu0 0
        %625 = vmatmul.mubr.bf16.gmra.mrb[0].mxu0 %v515
        %v626 = vpop.f32.mrb[0].mxu0
        %v627 = vadd.f32 %v378, %v626
        %v628 = vpop.f32.mrb[0].mxu0
        %v629 = vadd.f32 %v378, %v628
        %v630 = vpop.f32.mrb[0].mxu0
        %v631 = vadd.f32 %v383, %v630
        %v632 = vpop.f32.mrb[0].mxu0
        %v633 = vadd.f32 %v383, %v632
        %634 = vmatprep.mubr.bf16.mxu0 0
        %635 = vmatmul.mubr.bf16.gmra.mrb[0].mxu0 %v518
        %v636 = vpop.f32.mrb[0].mxu0
        %v637 = vadd.f32 %v388, %v636
        %v638 = vpop.f32.mrb[0].mxu0
        %v639 = vadd.f32 %v388, %v638
        %v640 = vpop.f32.mrb[0].mxu0
        %v641 = vadd.f32 %v393, %v640
        %v642 = vpop.f32.mrb[0].mxu0
        %v643 = vadd.f32 %v393, %v642
        %644 = vmatprep.mubr.bf16.mxu0 0
        %645 = vmatmul.mubr.bf16.gmra.mrb[0].mxu0 %v521
        %v646 = vpop.f32.mrb[0].mxu0
        %v647 = vadd.f32 %v398, %v646
        %v648 = vpop.f32.mrb[0].mxu0
        %v649 = vadd.f32 %v398, %v648
        %v650 = vpop.f32.mrb[0].mxu0
        %v651 = vadd.f32 %v403, %v650
        %v652 = vpop.f32.mrb[0].mxu0
        %v653 = vadd.f32 %v403, %v652
        %654 = vmatprep.mubr.bf16.mxu0 0
        %655 = vmatmul.mubr.bf16.gmra.mrb[0].mxu0 %v524
        %v656 = vpop.f32.mrb[0].mxu0
        %v657 = vadd.f32 %v408, %v656
        %v658 = vpop.f32.mrb[0].mxu0
        %v659 = vadd.f32 %v408, %v658
        %v660 = vpop.f32.mrb[0].mxu0
        %v661 = vadd.f32 %v413, %v660
        %v662 = vpop.f32.mrb[0].mxu0
        %v663 = vadd.f32 %v413, %v662
        %664 = vmatprep.mubr.bf16.mxu0 0
        %665 = vmatmul.mubr.bf16.gmra.mrb[0].mxu0 %v527
        %v666 = vpop.f32.mrb[0].mxu0
        %v667 = vadd.f32 %v418, %v666
        %v668 = vpop.f32.mrb[0].mxu0
        %v669 = vadd.f32 %v418, %v668
        %v670 = vpop.f32.mrb[0].mxu0
        %v671 = vadd.f32 %v423, %v670
        %v672 = vpop.f32.mrb[0].mxu0
        %v673 = vadd.f32 %v423, %v672
        %674 = vmatprep.mubr.bf16.mxu0 0
        %675 = vmatmul.mubr.bf16.gmra.mrb[0].mxu0 %v530
        %v676 = vpop.f32.mrb[0].mxu0
        %v677 = vadd.f32 %v428, %v676
        %v678 = vpop.f32.mrb[0].mxu0
        %v679 = vadd.f32 %v428, %v678
        %v680 = vpop.f32.mrb[0].mxu0
        %v681 = vadd.f32 %v433, %v680
        %v682 = vpop.f32.mrb[0].mxu0
        %v683 = vadd.f32 %v433, %v682
        %684 = vdwg.mxu0
        %v685 = vmax.f32 %v567, 0.0
        %v686 = vmax.f32 %v569, 0.0
        %v687 = vmax.f32 %v571, 0.0
        %v688 = vmax.f32 %v573, 0.0
        %v689 = vmax.f32 %v577, 0.0
        %v690 = vmax.f32 %v579, 0.0
        %v691 = vmax.f32 %v581, 0.0
        %v692 = vmax.f32 %v583, 0.0
        %v693 = vmax.f32 %v587, 0.0
        %v694 = vmax.f32 %v589, 0.0
        %v695 = vmax.f32 %v591, 0.0
        %v696 = vmax.f32 %v593, 0.0
        %v697 = vmax.f32 %v597, 0.0
        %v698 = vmax.f32 %v599, 0.0
        %v699 = vmax.f32 %v601, 0.0
        %v700 = vmax.f32 %v603, 0.0
        %v701 = vmax.f32 %v607, 0.0
        %v702 = vmax.f32 %v609, 0.0
        %v703 = vmax.f32 %v611, 0.0
        %v704 = vmax.f32 %v613, 0.0
        %v705 = vmax.f32 %v617, 0.0
        %v706 = vmax.f32 %v619, 0.0
        %v707 = vmax.f32 %v621, 0.0
        %v708 = vmax.f32 %v623, 0.0
        %v709 = vmax.f32 %v627, 0.0
        %v710 = vmax.f32 %v629, 0.0
        %v711 = vmax.f32 %v631, 0.0
        %v712 = vmax.f32 %v633, 0.0
        %v713 = vmax.f32 %v637, 0.0
        %v714 = vmax.f32 %v639, 0.0
        %v715 = vmax.f32 %v641, 0.0
        %v716 = vmax.f32 %v643, 0.0
        %v717 = vmax.f32 %v647, 0.0
        %v718 = vmax.f32 %v649, 0.0
        %v719 = vmax.f32 %v651, 0.0
        %v720 = vmax.f32 %v653, 0.0
        %v721 = vmax.f32 %v657, 0.0
        %v722 = vmax.f32 %v659, 0.0
        %v723 = vmax.f32 %v661, 0.0
        %v724 = vmax.f32 %v663, 0.0
        %v725 = vmax.f32 %v667, 0.0
        %v726 = vmax.f32 %v669, 0.0
        %v727 = vmax.f32 %v671, 0.0
        %v728 = vmax.f32 %v673, 0.0
        %v729 = vmax.f32 %v677, 0.0
        %v730 = vmax.f32 %v679, 0.0
        %v731 = vmax.f32 %v681, 0.0
        %v732 = vmax.f32 %v683, 0.0
        %v733 = vpack.c.bf16 %v687, %v685
        %v734 = vpack.c.bf16 %v688, %v686
        %v735 = vpack.c.bf16 %v691, %v689
        %v736 = vpack.c.bf16 %v692, %v690
        %v737 = vpack.c.bf16 %v695, %v693
        %v738 = vpack.c.bf16 %v696, %v694
        %v739 = vpack.c.bf16 %v699, %v697
        %v740 = vpack.c.bf16 %v700, %v698
        %v741 = vpack.c.bf16 %v703, %v701
        %v742 = vpack.c.bf16 %v704, %v702
        %v743 = vpack.c.bf16 %v707, %v705
        %v744 = vpack.c.bf16 %v708, %v706
        %v745 = vpack.c.bf16 %v711, %v709
        %v746 = vpack.c.bf16 %v712, %v710
        %v747 = vpack.c.bf16 %v715, %v713
        %v748 = vpack.c.bf16 %v716, %v714
        %v749 = vpack.c.bf16 %v719, %v717
        %v750 = vpack.c.bf16 %v720, %v718
        %v751 = vpack.c.bf16 %v723, %v721
        %v752 = vpack.c.bf16 %v724, %v722
        %v753 = vpack.c.bf16 %v727, %v725
        %v754 = vpack.c.bf16 %v728, %v726
        %v755 = vpack.c.bf16 %v731, %v729
        %v756 = vpack.c.bf16 %v732, %v730
        %v757 = vld [vmem:[%s3] sm:$0xff]
        %v758 = vld [vmem:[%s3 + $0x8] sm:$0xff]
        %v759 = vld [vmem:[%s3 + $0x10] sm:$0xff]
        %v760 = vld [vmem:[%s3 + $0x18] sm:$0xff]
        %v761 = vld [vmem:[%s3 + $0x20] sm:$0xff]
        %v762 = vld [vmem:[%s3 + $0x28] sm:$0xff]
        %v763 = vld [vmem:[%s3 + $0x30] sm:$0xff]
        %v764 = vld [vmem:[%s3 + $0x38] sm:$0xff]
        %v765 = vld [vmem:[%s3 + $0x40] sm:$0xff]
        %v766 = vld [vmem:[%s3 + $0x48] sm:$0xff]
        %v767 = vld [vmem:[%s3 + $0x50] sm:$0xff]
        %v768 = vld [vmem:[%s3 + $0x58] sm:$0xff]
        %v769 = vld [vmem:[%s3 + $0x60] sm:$0xff]
        %v770 = vld [vmem:[%s3 + $0x68] sm:$0xff]
        %v771 = vld [vmem:[%s3 + $0x70] sm:$0xff]
        %v772 = vld [vmem:[%s3 + $0x78] sm:$0xff]
        %v773 = vld [vmem:[%s4] sm:$0xff]
        %v774 = vld [vmem:[%s4 + $0x8] sm:$0xff]
        %v775 = vld [vmem:[%s4 + $0x10] sm:$0xff]
        %v776 = vld [vmem:[%s4 + $0x18] sm:$0xff]
        %v777 = vld [vmem:[%s4 + $0x20] sm:$0xff]
        %v778 = vld [vmem:[%s4 + $0x28] sm:$0xff]
        %v779 = vld [vmem:[%s4 + $0x30] sm:$0xff]
        %v780 = vld [vmem:[%s4 + $0x38] sm:$0xff]
        %v781 = vld [vmem:[%s4 + $0x40] sm:$0xff]
        %v782 = vld [vmem:[%s4 + $0x48] sm:$0xff]
        %v783 = vld [vmem:[%s4 + $0x50] sm:$0xff]
        %v784 = vld [vmem:[%s4 + $0x58] sm:$0xff]
        %v785 = vld [vmem:[%s4 + $0x60] sm:$0xff]
        %v786 = vld [vmem:[%s4 + $0x68] sm:$0xff]
        %v787 = vld [vmem:[%s4 + $0x70] sm:$0xff]
        %v788 = vld [vmem:[%s4 + $0x78] sm:$0xff]
        %790 = vset.pattern.permute.xlu0 0
        %791 = vperm.xlu0 %790, %v773
        %v792 = vpop.permute.xlu0 %791
        %795 = vset.pattern.permute.xlu0 0
        %796 = vperm.xlu0 %795, %v774
        %v797 = vpop.permute.xlu0 %796
        %800 = vset.pattern.permute.xlu0 0
        %801 = vperm.xlu0 %800, %v775
        %v802 = vpop.permute.xlu0 %801
        %805 = vset.pattern.permute.xlu0 0
        %806 = vperm.xlu0 %805, %v776
        %v807 = vpop.permute.xlu0 %806
        %810 = vset.pattern.permute.xlu0 0
        %811 = vperm.xlu0 %810, %v777
        %v812 = vpop.permute.xlu0 %811
        %815 = vset.pattern.permute.xlu0 0
        %816 = vperm.xlu0 %815, %v778
        %v817 = vpop.permute.xlu0 %816
        %820 = vset.pattern.permute.xlu0 0
        %821 = vperm.xlu0 %820, %v779
        %v822 = vpop.permute.xlu0 %821
        %825 = vset.pattern.permute.xlu0 0
        %826 = vperm.xlu0 %825, %v780
        %v827 = vpop.permute.xlu0 %826
        %830 = vset.pattern.permute.xlu0 0
        %831 = vperm.xlu0 %830, %v781
        %v832 = vpop.permute.xlu0 %831
        %835 = vset.pattern.permute.xlu0 0
        %836 = vperm.xlu0 %835, %v782
        %v837 = vpop.permute.xlu0 %836
        %840 = vset.pattern.permute.xlu0 0
        %841 = vperm.xlu0 %840, %v783
        %v842 = vpop.permute.xlu0 %841
        %845 = vset.pattern.permute.xlu0 0
        %846 = vperm.xlu0 %845, %v784
        %v847 = vpop.permute.xlu0 %846
        %850 = vset.pattern.permute.xlu0 0
        %851 = vperm.xlu0 %850, %v785
        %v852 = vpop.permute.xlu0 %851
        %855 = vset.pattern.permute.xlu0 0
        %856 = vperm.xlu0 %855, %v786
        %v857 = vpop.permute.xlu0 %856
        %860 = vset.pattern.permute.xlu0 0
        %861 = vperm.xlu0 %860, %v787
        %v862 = vpop.permute.xlu0 %861
        %865 = vset.pattern.permute.xlu0 0
        %866 = vperm.xlu0 %865, %v788
        %v867 = vpop.permute.xlu0 %866
        %v885 = vunpack.c.l.b16 %v757
        %v886 = vunpack.c.h.b16 %v757
        %v887 = vunpack.c.l.b16 %v758
        %v888 = vunpack.c.h.b16 %v758
        %v889 = vunpack.c.l.b16 %v759
        %v890 = vunpack.c.h.b16 %v759
        %v891 = vunpack.c.l.b16 %v760
        %v892 = vunpack.c.h.b16 %v760
        %v893 = vunpack.c.l.b16 %v761
        %v894 = vunpack.c.h.b16 %v761
        %v895 = vunpack.c.l.b16 %v762
        %v896 = vunpack.c.h.b16 %v762
        %v897 = vunpack.c.l.b16 %v763
        %v898 = vunpack.c.h.b16 %v763
        %v899 = vunpack.c.l.b16 %v764
        %v900 = vunpack.c.h.b16 %v764
        %v901 = vunpack.c.l.b16 %v765
        %v902 = vunpack.c.h.b16 %v765
        %v903 = vunpack.c.l.b16 %v766
        %v904 = vunpack.c.h.b16 %v766
        %v905 = vunpack.c.l.b16 %v767
        %v906 = vunpack.c.h.b16 %v767
        %v907 = vunpack.c.l.b16 %v768
        %v908 = vunpack.c.h.b16 %v768
        %v909 = vunpack.c.l.b16 %v769
        %v910 = vunpack.c.h.b16 %v769
        %v911 = vunpack.c.l.b16 %v770
        %v912 = vunpack.c.h.b16 %v770
        %v913 = vunpack.c.l.b16 %v771
        %v914 = vunpack.c.h.b16 %v771
        %v915 = vunpack.c.l.b16 %v772
        %v916 = vunpack.c.h.b16 %v772
        %v917 = vpack.c.b16 %v887, %v885
        %v918 = vpack.c.b16 %v888, %v886
        %v919 = vpack.c.b16 %v891, %v889
        %v920 = vpack.c.b16 %v892, %v890
        %v921 = vpack.c.b16 %v895, %v893
        %v922 = vpack.c.b16 %v896, %v894
        %v923 = vpack.c.b16 %v899, %v897
        %v924 = vpack.c.b16 %v900, %v898
        %v925 = vpack.c.b16 %v903, %v901
        %v926 = vpack.c.b16 %v904, %v902
        %v927 = vpack.c.b16 %v907, %v905
        %v928 = vpack.c.b16 %v908, %v906
        %v929 = vpack.c.b16 %v911, %v909
        %v930 = vpack.c.b16 %v912, %v910
        %v931 = vpack.c.b16 %v915, %v913
        %v932 = vpack.c.b16 %v916, %v914
        %vm941 = vcmask 523264
        %v943 = vsel %vm941, %v918, 0
        %v946 = vsel %vm941, %v920, 0
        %v949 = vsel %vm941, %v922, 0
        %v952 = vsel %vm941, %v924, 0
        %v955 = vsel %vm941, %v926, 0
        %v958 = vsel %vm941, %v928, 0
        %v961 = vsel %vm941, %v930, 0
        %v964 = vsel %vm941, %v932, 0
        %966 = vmatprep.subr.bf16.mxu0 %v734
        %967 = vmatpush1.bf16.msra.mxu0 %v733
        %968 = vmatprep.subr.bf16.mxu0 %v736
        %969 = vmatpush1.bf16.msra.mxu0 %v735
        %970 = vmatprep.subr.bf16.mxu0 %v738
        %971 = vmatpush1.bf16.msra.mxu0 %v737
        %972 = vmatprep.subr.bf16.mxu0 %v740
        %973 = vmatpush1.bf16.msra.mxu0 %v739
        %974 = vmatprep.subr.bf16.mxu0 %v742
        %975 = vmatpush1.bf16.msra.mxu0 %v741
        %976 = vmatprep.subr.bf16.mxu0 %v744
        %977 = vmatpush1.bf16.msra.mxu0 %v743
        %978 = vmatprep.subr.bf16.mxu0 %v746
        %979 = vmatpush1.bf16.msra.mxu0 %v745
        %980 = vmatprep.subr.bf16.mxu0 %v748
        %981 = vmatpush1.bf16.msra.mxu0 %v747
        %982 = vmatprep.subr.bf16.mxu0 %v750
        %983 = vmatpush1.bf16.msra.mxu0 %v749
        %984 = vmatprep.subr.bf16.mxu0 %v752
        %985 = vmatpush1.bf16.msra.mxu0 %v751
        %986 = vmatprep.subr.bf16.mxu0 %v754
        %987 = vmatpush1.bf16.msra.mxu0 %v753
        %988 = vmatprep.subr.bf16.mxu0 %v756
        %989 = vmatpush1.bf16.msra.mxu0 %v755
        %990 = vmatprep.subr.bf16.mxu0 0
        %991 = vmatpush1.bf16.msra.mxu0 0
        %992 = vmatprep.subr.bf16.mxu0 0
        %993 = vmatpush1.bf16.msra.mxu0 0
        %994 = vmatprep.subr.bf16.mxu0 0
        %995 = vmatpush1.bf16.msra.mxu0 0
        %996 = vmatprep.subr.bf16.mxu0 0
        %997 = vmatpush1.bf16.msra.mxu0 0
        %998 = vmatprep.mubr.bf16.mxu0 %v943
        %999 = vmatmul.mubr.bf16.gmra.mrb[0].mxu0 %v917
        %v1000 = vpop.f32.mrb[0].mxu0
        %v1001 = vadd.f32 %v792, %v1000
        %v1002 = vpop.f32.mrb[0].mxu0
        %v1003 = vadd.f32 %v792, %v1002
        %v1004 = vpop.f32.mrb[0].mxu0
        %v1005 = vadd.f32 %v797, %v1004
        %v1006 = vpop.f32.mrb[0].mxu0
        %v1007 = vadd.f32 %v797, %v1006
        %1008 = vmatprep.mubr.bf16.mxu0 %v946
        %1009 = vmatmul.mubr.bf16.gmra.mrb[0].mxu0 %v919
        %v1010 = vpop.f32.mrb[0].mxu0
        %v1011 = vadd.f32 %v802, %v1010
        %v1012 = vpop.f32.mrb[0].mxu0
        %v1013 = vadd.f32 %v802, %v1012
        %v1014 = vpop.f32.mrb[0].mxu0
        %v1015 = vadd.f32 %v807, %v1014
        %v1016 = vpop.f32.mrb[0].mxu0
        %v1017 = vadd.f32 %v807, %v1016
        %1018 = vmatprep.mubr.bf16.mxu0 %v949
        %1019 = vmatmul.mubr.bf16.gmra.mrb[0].mxu0 %v921
        %v1020 = vpop.f32.mrb[0].mxu0
        %v1021 = vadd.f32 %v812, %v1020
        %v1022 = vpop.f32.mrb[0].mxu0
        %v1023 = vadd.f32 %v812, %v1022
        %v1024 = vpop.f32.mrb[0].mxu0
        %v1025 = vadd.f32 %v817, %v1024
        %v1026 = vpop.f32.mrb[0].mxu0
        %v1027 = vadd.f32 %v817, %v1026
        %1028 = vmatprep.mubr.bf16.mxu0 %v952
        %1029 = vmatmul.mubr.bf16.gmra.mrb[0].mxu0 %v923
        %v1030 = vpop.f32.mrb[0].mxu0
        %v1031 = vadd.f32 %v822, %v1030
        %v1032 = vpop.f32.mrb[0].mxu0
        %v1033 = vadd.f32 %v822, %v1032
        %v1034 = vpop.f32.mrb[0].mxu0
        %v1035 = vadd.f32 %v827, %v1034
        %v1036 = vpop.f32.mrb[0].mxu0
        %v1037 = vadd.f32 %v827, %v1036
        %1038 = vmatprep.mubr.bf16.mxu0 %v955
        %1039 = vmatmul.mubr.bf16.gmra.mrb[0].mxu0 %v925
        %v1040 = vpop.f32.mrb[0].mxu0
        %v1041 = vadd.f32 %v832, %v1040
        %v1042 = vpop.f32.mrb[0].mxu0
        %v1043 = vadd.f32 %v832, %v1042
        %v1044 = vpop.f32.mrb[0].mxu0
        %v1045 = vadd.f32 %v837, %v1044
        %v1046 = vpop.f32.mrb[0].mxu0
        %v1047 = vadd.f32 %v837, %v1046
        %1048 = vmatprep.mubr.bf16.mxu0 %v958
        %1049 = vmatmul.mubr.bf16.gmra.mrb[0].mxu0 %v927
        %v1050 = vpop.f32.mrb[0].mxu0
        %v1051 = vadd.f32 %v842, %v1050
        %v1052 = vpop.f32.mrb[0].mxu0
        %v1053 = vadd.f32 %v842, %v1052
        %v1054 = vpop.f32.mrb[0].mxu0
        %v1055 = vadd.f32 %v847, %v1054
        %v1056 = vpop.f32.mrb[0].mxu0
        %v1057 = vadd.f32 %v847, %v1056
        %1058 = vmatprep.mubr.bf16.mxu0 %v961
        %1059 = vmatmul.mubr.bf16.gmra.mrb[0].mxu0 %v929
        %v1060 = vpop.f32.mrb[0].mxu0
        %v1061 = vadd.f32 %v852, %v1060
        %v1062 = vpop.f32.mrb[0].mxu0
        %v1063 = vadd.f32 %v852, %v1062
        %v1064 = vpop.f32.mrb[0].mxu0
        %v1065 = vadd.f32 %v857, %v1064
        %v1066 = vpop.f32.mrb[0].mxu0
        %v1067 = vadd.f32 %v857, %v1066
        %1068 = vmatprep.mubr.bf16.mxu0 %v964
        %1069 = vmatmul.mubr.bf16.gmra.mrb[0].mxu0 %v931
        %v1070 = vpop.f32.mrb[0].mxu0
        %v1071 = vadd.f32 %v862, %v1070
        %v1072 = vpop.f32.mrb[0].mxu0
        %v1073 = vadd.f32 %v862, %v1072
        %v1074 = vpop.f32.mrb[0].mxu0
        %v1075 = vadd.f32 %v867, %v1074
        %v1076 = vpop.f32.mrb[0].mxu0
        %v1077 = vadd.f32 %v867, %v1076
        %1078 = vdwg.mxu0
        %v1079 = vpack.c.bf16 %v1005, %v1001
        %v1080 = vpack.c.bf16 %v1007, %v1003
        %v1081 = vpack.c.bf16 %v1015, %v1011
        %v1082 = vpack.c.bf16 %v1017, %v1013
        %v1083 = vpack.c.bf16 %v1025, %v1021
        %v1084 = vpack.c.bf16 %v1027, %v1023
        %v1085 = vpack.c.bf16 %v1035, %v1031
        %v1086 = vpack.c.bf16 %v1037, %v1033
        %v1087 = vpack.c.bf16 %v1045, %v1041
        %v1088 = vpack.c.bf16 %v1047, %v1043
        %v1089 = vpack.c.bf16 %v1055, %v1051
        %v1090 = vpack.c.bf16 %v1057, %v1053
        %v1091 = vpack.c.bf16 %v1065, %v1061
        %v1092 = vpack.c.bf16 %v1067, %v1063
        %v1093 = vpack.c.bf16 %v1075, %v1071
        %v1094 = vpack.c.bf16 %v1077, %v1073
        %v1111 = vunpack.c.l.b16 %v1079
        %v1112 = vunpack.c.l.b16 %v1080
        %v1113 = vunpack.c.h.b16 %v1079
        %v1114 = vunpack.c.h.b16 %v1080
        %v1115 = vunpack.c.l.b16 %v1081
        %v1116 = vunpack.c.l.b16 %v1082
        %v1117 = vunpack.c.h.b16 %v1081
        %v1118 = vunpack.c.h.b16 %v1082
        %v1119 = vunpack.c.l.b16 %v1083
        %v1120 = vunpack.c.l.b16 %v1084
        %v1121 = vunpack.c.h.b16 %v1083
        %v1122 = vunpack.c.h.b16 %v1084
        %v1123 = vunpack.c.l.b16 %v1085
        %v1124 = vunpack.c.l.b16 %v1086
        %v1125 = vunpack.c.h.b16 %v1085
        %v1126 = vunpack.c.h.b16 %v1086
        %v1127 = vunpack.c.l.b16 %v1087
        %v1128 = vunpack.c.l.b16 %v1088
        %v1129 = vunpack.c.h.b16 %v1087
        %v1130 = vunpack.c.h.b16 %v1088
        %v1131 = vunpack.c.l.b16 %v1089
        %v1132 = vunpack.c.l.b16 %v1090
        %v1133 = vunpack.c.h.b16 %v1089
        %v1134 = vunpack.c.h.b16 %v1090
        %v1135 = vunpack.c.l.b16 %v1091
        %v1136 = vunpack.c.l.b16 %v1092
        %v1137 = vunpack.c.h.b16 %v1091
        %v1138 = vunpack.c.h.b16 %v1092
        %v1139 = vunpack.c.l.b16 %v1093
        %v1140 = vunpack.c.l.b16 %v1094
        %v1141 = vunpack.c.h.b16 %v1093
        %v1142 = vunpack.c.h.b16 %v1094
        %v1143 = vpack.c.b16 %v1112, %v1111
        %v1144 = vpack.c.b16 %v1114, %v1113
        %v1145 = vpack.c.b16 %v1116, %v1115
        %v1146 = vpack.c.b16 %v1118, %v1117
        %v1147 = vpack.c.b16 %v1120, %v1119
        %v1148 = vpack.c.b16 %v1122, %v1121
        %v1149 = vpack.c.b16 %v1124, %v1123
        %v1150 = vpack.c.b16 %v1126, %v1125
        %v1151 = vpack.c.b16 %v1128, %v1127
        %v1152 = vpack.c.b16 %v1130, %v1129
        %v1153 = vpack.c.b16 %v1132, %v1131
        %v1154 = vpack.c.b16 %v1134, %v1133
        %v1155 = vpack.c.b16 %v1136, %v1135
        %v1156 = vpack.c.b16 %v1138, %v1137
        %v1157 = vpack.c.b16 %v1140, %v1139
        %v1158 = vpack.c.b16 %v1142, %v1141
        %1175 = vst [vmem:[%s242] sm:$0xff] %v1143
        %1176 = vst [vmem:[%s242 + $0x8] sm:$0xff] %v1144
        %1177 = vst [vmem:[%s242 + $0x10] sm:$0xff] %v1145
        %1178 = vst [vmem:[%s242 + $0x18] sm:$0xff] %v1146
        %1179 = vst [vmem:[%s242 + $0x20] sm:$0xff] %v1147
        %1180 = vst [vmem:[%s242 + $0x28] sm:$0xff] %v1148
        %1181 = vst [vmem:[%s242 + $0x30] sm:$0xff] %v1149
        %1182 = vst [vmem:[%s242 + $0x38] sm:$0xff] %v1150
        %1183 = vst [vmem:[%s242 + $0x40] sm:$0xff] %v1151
        %1184 = vst [vmem:[%s242 + $0x48] sm:$0xff] %v1152
        %1185 = vst [vmem:[%s242 + $0x50] sm:$0xff] %v1153
        %1186 = vst [vmem:[%s242 + $0x58] sm:$0xff] %v1154
        %1187 = vst [vmem:[%s242 + $0x60] sm:$0xff] %v1155
        %1188 = vst [vmem:[%s242 + $0x68] sm:$0xff] %v1156
        %1189 = vst [vmem:[%s242 + $0x70] sm:$0xff] %v1157
        %1190 = vst [vmem:[%s242 + $0x78] sm:$0xff] %v1158
        %s1191 = sand.u32 %s153, 1
        %s1192 = scalar_lea.sflag [#allocation3], %s1191
        %s1193 = sand.u32 %s153, 1
        %s1194 = smul.addr %s1193, 128
        %s1195 = scalar_lea.vmem [#allocation2], %s1194
        // Predicated region
        $region41: #{tpu_custom_call.1} parent=39 // pred_check
          %p1196 = pneg %p163
        $region42: #{tpu_custom_call.1} parent=39 // pred_check_branch
          %1198 = sbr.rel (%p1196) target = $region44
        $region43: #{tpu_custom_call.1} parent=39 // pred_region
          %s1199 = smul.u32 2, %s24
          %s1201 = ssub.s32 2048, 2048
          %1202 = vsyncadd %s1192, %s1201
          %s1203 = smul.addr %s23, 32
          %s1204 = sadd.s32 %s1199, %s1203
          %s1205 = smul.addr %s1204, 64
          %s1206 = scalar_lea.hbm %s5, %s1205
          %s1207 = sshll.u32 %s1195, 4
          %s1208 = int_to_ptr.vmem [resolvable:$true] %s1207
          %1213 = dma.vmem_to_hbm [thread:$0]  %s1208, 2048, %s1206, %s1192, 128, 128, 8
        $region44: #{tpu_custom_call.1} parent=39 // pred_fallthru
          _
      $region40: #{tpu_custom_call.1} parent=5 // pred_fallthru
        _
      %p1214 = scmp.le.s32.totalorder 2, %s14
      // Predicated region
      $region45: #{tpu_custom_call.1} parent=5 // pred_check
        %p1215 = pneg %p1214
      $region46: #{tpu_custom_call.1} parent=5 // pred_check_branch
        %1217 = sbr.rel (%p1215) target = $region48
      $region47: #{tpu_custom_call.1} parent=5 // pred_region
        %s1218 = ssub.s32 %s14, 2
        // Predicated region
        $region49: #{tpu_custom_call.1} parent=47 // pred_check
          %p1219 = pneg %p169
        $region50: #{tpu_custom_call.1} parent=47 // pred_check_branch
          %1221 = sbr.rel (%p1219) target = $region52
        $region51: #{tpu_custom_call.1} parent=47 // pred_region
          %s1222 = sand.u32 %s154, 1
          %s1223 = scalar_lea.sflag [#allocation3], %s1222
          %s1224 = sand.u32 %s154, 1
          %s1225 = smul.addr %s1224, 128
          %s1226 = scalar_lea.vmem [#allocation2], %s1225
          %1227 = dma.done %s1223, 2048
        $region52: #{tpu_custom_call.1} parent=47 // pred_fallthru
          _
      $region48: #{tpu_custom_call.1} parent=5 // pred_fallthru
        _
    $region6: #{tpu_custom_call.1} parent=1 // loop_footer
      %s18 = sadd.s32 1, %s14
    $region7: #{tpu_custom_call.1} parent=1 // loop_footer_branch
      %13 = sbr.rel target = $region3
    $region8: #{tpu_custom_call.1} parent=1 // loop_exit
      _
    %1228 = vsyncpa [#allocation3], 1
    %s1229 = scalar_lea.sflag [#allocation3], 1
    %1230 = vsyncpa %s1229, 1

</llo_original>
